<compile_context>
chip_gen: v5e
topology: v5e:2x2
jax: 0.10.0
libtpu: 0.0.40
codegen_flags: <defaults>
</compile_context>

<pallas_src>
import functools

import jax
import jax.numpy as jnp
from jax.experimental import pallas as pl
from jax.experimental.pallas import tpu as pltpu

# ----------------------------- model config ---------------------------------
CONFIG = dict(tcn_channels=[8, 16], kernel_size=3, use_forecast=True, future_hours=8)
HIST_DIM = 4
FCST_DIM = 3
B = 2     # batch
T = 16    # history sequence length


# ------------------------------ fused kernel --------------------------------
def _fused_tcn_kernel(hist_ref, fcst_ref, *rest, K, T, channels):
    """Entire TCN forward in a single kernel invocation.

    hist_ref : (B, T, hist_dim)       channels-last history
    fcst_ref : (B, fcst_dim * H)      flattened forecast
    rest     : w1,b1, ..., wL,bL, wf,bf, wh,bh, out_ref
               conv weight wj : (K*Cin_j, Cout_j)  (im2col-flattened)
               conv bias   bj : (1, Cout_j)
               wf : (fcst_dim*H, C_L)  bf : (1, C_L)
               wh : (C_L, H)           bh : (1, H)
    out_ref  : (B, H)
    """
    L = len(channels)
    o_ref = rest[-1]
    conv_refs = [(rest[2 * j], rest[2 * j + 1]) for j in range(L)]
    wf_ref, bf_ref, wh_ref, bh_ref = rest[2 * L:2 * L + 4]

    pad = K // 2
    Bn = hist_ref.shape[0]

    # Receptive field: only the last 1 + L*pad history rows feed the output.
    n_in = 1 + L * pad
    x = hist_ref[:, T - n_in:T, :]                         # (B, n_in, hist_dim)

    for j in range(L):                                     # static python loop
        n_out = 1 + (L - 1 - j) * pad                      # timesteps this layer needs
        cin = x.shape[-1]
        cout = channels[j]
        w_ref, b_ref = conv_refs[j]
        # In-kernel "same" padding: only the right edge (t >= T) is ever hit here.
        xp = jnp.concatenate(
            [x, jnp.zeros((Bn, pad, cin), jnp.float32)], axis=1)   # (B, n_out+K-1, cin)
        # im2col -> a single MXU matmul per layer (instead of K tap matmuls).
        cols = jnp.concatenate([xp[:, k:k + n_out, :] for k in range(K)],
                               axis=-1)                            # (B, n_out, K*cin)
        y = jnp.dot(cols.reshape(Bn * n_out, K * cin), w_ref[...],
                    preferred_element_type=jnp.float32) + b_ref[...]
        x = jnp.maximum(y, 0.0).reshape(Bn, n_out, cout)           # fused ReLU

    last = x.reshape(Bn, channels[-1])                     # conv output at t = T-1

    # forecast projection + residual add
    z = (last
         + jnp.dot(fcst_ref[...], wf_ref[...], preferred_element_type=jnp.float32)
         + bf_ref[...])
    # head Linear + Softplus (beta=1, threshold=20), matching torch.nn.Softplus
    y = jnp.dot(z, wh_ref[...], preferred_element_type=jnp.float32) + bh_ref[...]
    o_ref[...] = jnp.where(y > 20.0, y, jnp.log1p(jnp.exp(jnp.minimum(y, 20.0))))


# --------------------------------- wrapper -----------------------------------
def tcn_forward(hist, fcst, params):
    """hist: (B, T, hist_dim) f32; fcst: (B, future_hours, fcst_dim) f32."""
    K = CONFIG['kernel_size']
    channels = tuple(CONFIG['tcn_channels'])
    H = CONFIG['future_hours']
    L = len(channels)
    pad = K // 2
    Bb, Tt, _ = hist.shape
    assert Tt >= 1 + L * pad, "history too short for the receptive-field shortcut"

    f_flat = fcst.reshape(Bb, -1)                              # (B, fcst_dim*H)
    flat_conv = []
    for (w, b) in params['conv']:                              # w: (K, Cin, Cout)
        flat_conv += [w.reshape(-1, w.shape[-1]), b]           # -> (K*Cin, Cout)
    wf, bf = params['fcst_proj']
    wh, bh = params['head']
    inputs = [hist, f_flat, *flat_conv, wf, bf, wh, bh]

    kern = functools.partial(_fused_tcn_kernel, K=K, T=Tt, channels=channels)
    vmem = pl.BlockSpec(memory_space=pltpu.MemorySpace.VMEM)   # whole array in VMEM
    return pl.pallas_call(
        kern,
        out_shape=jax.ShapeDtypeStruct((Bb, H), jnp.float32),
        in_specs=[vmem] * len(inputs),
        out_specs=vmem,
    )(*inputs)


# ----------------------- pure-JAX reference (sanity) -------------------------
def tcn_forward_ref(hist, fcst, params):
    K = CONFIG['kernel_size']
    pad = K // 2
    Bb, Tt, _ = hist.shape
    x = hist
    for (w, b) in params['conv']:
        xp = jnp.pad(x, ((0, 0), (pad, pad), (0, 0)))
        acc = sum(jnp.einsum('btc,cd->btd', xp[:, k:k + Tt, :], w[k]) for k in range(K))
        x = jnp.maximum(acc + b, 0.0)
    last = x[:, -1, :]
    f_flat = fcst.reshape(Bb, -1)
    wf, bf = params['fcst_proj']
    wh, bh = params['head']
    z = last + f_flat @ wf + bf
    y = z @ wh + bh
    return jnp.where(y > 20.0, y, jnp.log1p(jnp.exp(jnp.minimum(y, 20.0))))


# --------------------------- param init --------------------------------------
def init_params(key):
    channels = CONFIG['tcn_channels']
    K = CONFIG['kernel_size']
    H = CONFIG['future_hours']
    keys = jax.random.split(key, 16)
    ki = iter(range(16))
    conv = []
    in_ch = HIST_DIM
    for out_ch in channels:
        w = 0.2 * jax.random.normal(keys[next(ki)], (K, in_ch, out_ch), jnp.float32)
        b = 0.1 * jax.random.normal(keys[next(ki)], (1, out_ch), jnp.float32)
        conv.append((w, b))
        in_ch = out_ch
    C = channels[-1]
    wf = 0.2 * jax.random.normal(keys[next(ki)], (FCST_DIM * H, C), jnp.float32)
    bf = 0.1 * jax.random.normal(keys[next(ki)], (1, C), jnp.float32)
    wh = 0.2 * jax.random.normal(keys[next(ki)], (C, H), jnp.float32)
    bh = 0.1 * jax.random.normal(keys[next(ki)], (1, H), jnp.float32)
    return dict(conv=conv, fcst_proj=(wf, bf), head=(wh, bh))


# ------------------------------ main ------------------------------------------
if __name__ == "__main__":
    key = jax.random.PRNGKey(0)
    kp, kh, kf = jax.random.split(key, 3)
    params = init_params(kp)
    hist = jax.random.normal(kh, (B, T, HIST_DIM), jnp.float32)
    fcst = jax.random.normal(kf, (B, CONFIG['future_hours'], FCST_DIM), jnp.float32)

    # TODO(synk): the hist_dim==0 / fcst=None branches of TCNModel.forward are not
    # exercised by this config and are not implemented here.
    out = jax.jit(tcn_forward)(hist, fcst, params)
    out = jax.block_until_ready(out)

    ref = tcn_forward_ref(hist, fcst, params)
    assert out.shape == (B, CONFIG['future_hours'])
    assert jnp.allclose(out, ref, atol=1e-4, rtol=1e-4), "Pallas result mismatch vs reference"

    print("KERNEL_OK")
</pallas_src>

<mosaic_0001>
module attributes {stable_mosaic.version = 11 : i64} {
  func.func @_fused_tcn_kernel(%arg0: memref<2x16x4xf32, #tpu.memory_space<vmem>>, %arg1: memref<2x24xf32, #tpu.memory_space<vmem>>, %arg2: memref<12x8xf32, #tpu.memory_space<vmem>>, %arg3: memref<1x8xf32, #tpu.memory_space<vmem>>, %arg4: memref<24x16xf32, #tpu.memory_space<vmem>>, %arg5: memref<1x16xf32, #tpu.memory_space<vmem>>, %arg6: memref<24x16xf32, #tpu.memory_space<vmem>>, %arg7: memref<1x16xf32, #tpu.memory_space<vmem>>, %arg8: memref<16x8xf32, #tpu.memory_space<vmem>>, %arg9: memref<1x8xf32, #tpu.memory_space<vmem>>, %arg10: memref<2x8xf32, #tpu.memory_space<vmem>>) attributes {dimension_semantics = [], scalar_prefetch = 0 : i64, scratch_operands = 0 : i64, tpu.core_type = #tpu.core_type<tc>} {
    %c0 = arith.constant 0 : index
    %c13 = arith.constant 13 : index
    %c0_0 = arith.constant 0 : index
    %0 = vector.load %arg0[%c0, %c13, %c0_0] : memref<2x16x4xf32, #tpu.memory_space<vmem>>, vector<2x3x4xf32>
    %cst = arith.constant 0.000000e+00 : f32
    %1 = vector.broadcast %cst : f32 to vector<2x1x4xf32>
    %2 = tpu.concatenate %0, %1 in 1 : vector<2x3x4xf32>, vector<2x1x4xf32> -> vector<2x4x4xf32>
    %3 = vector.extract_strided_slice %2 {offsets = [0, 0, 0], sizes = [2, 2, 4], strides = [1, 1, 1]} : vector<2x4x4xf32> to vector<2x2x4xf32>
    %4 = vector.extract_strided_slice %2 {offsets = [0, 1, 0], sizes = [2, 2, 4], strides = [1, 1, 1]} : vector<2x4x4xf32> to vector<2x2x4xf32>
    %5 = vector.extract_strided_slice %2 {offsets = [0, 2, 0], sizes = [2, 2, 4], strides = [1, 1, 1]} : vector<2x4x4xf32> to vector<2x2x4xf32>
    %6 = tpu.concatenate %3, %4, %5 in 2 : vector<2x2x4xf32>, vector<2x2x4xf32>, vector<2x2x4xf32> -> vector<2x2x12xf32>
    %7 = vector.shape_cast %6 : vector<2x2x12xf32> to vector<4x12xf32>
    %c0_1 = arith.constant 0 : index
    %c0_2 = arith.constant 0 : index
    %8 = vector.load %arg2[%c0_1, %c0_2] : memref<12x8xf32, #tpu.memory_space<vmem>>, vector<12x8xf32>
    %cst_3 = arith.constant dense<0.000000e+00> : vector<4x8xf32>
    %9 = tpu.matmul %7, %8, %cst_3 {dimension_numbers = #tpu.dot_dimension_numbers<[1], [0], [0], [1], [0, 0, 1, 1], [], []>} : vector<4x12xf32>, vector<12x8xf32>, vector<4x8xf32> -> vector<4x8xf32>
    %c0_4 = arith.constant 0 : index
    %c0_5 = arith.constant 0 : index
    %10 = vector.load %arg3[%c0_4, %c0_5] : memref<1x8xf32, #tpu.memory_space<vmem>>, vector<1x8xf32>
    %11 = vector.broadcast %10 : vector<1x8xf32> to vector<4x8xf32>
    %12 = arith.addf %9, %11 : vector<4x8xf32>
    %cst_6 = arith.constant 0.000000e+00 : f32
    %13 = vector.broadcast %cst_6 : f32 to vector<4x8xf32>
    %14 = arith.maximumf %12, %13 : vector<4x8xf32>
    %15 = vector.shape_cast %14 : vector<4x8xf32> to vector<2x2x8xf32>
    %cst_7 = arith.constant 0.000000e+00 : f32
    %16 = vector.broadcast %cst_7 : f32 to vector<2x1x8xf32>
    %17 = tpu.concatenate %15, %16 in 1 : vector<2x2x8xf32>, vector<2x1x8xf32> -> vector<2x3x8xf32>
    %18 = vector.extract_strided_slice %17 {offsets = [0, 0, 0], sizes = [2, 1, 8], strides = [1, 1, 1]} : vector<2x3x8xf32> to vector<2x1x8xf32>
    %19 = vector.extract_strided_slice %17 {offsets = [0, 1, 0], sizes = [2, 1, 8], strides = [1, 1, 1]} : vector<2x3x8xf32> to vector<2x1x8xf32>
    %20 = vector.extract_strided_slice %17 {offsets = [0, 2, 0], sizes = [2, 1, 8], strides = [1, 1, 1]} : vector<2x3x8xf32> to vector<2x1x8xf32>
    %21 = tpu.concatenate %18, %19, %20 in 2 : vector<2x1x8xf32>, vector<2x1x8xf32>, vector<2x1x8xf32> -> vector<2x1x24xf32>
    %22 = vector.shape_cast %21 : vector<2x1x24xf32> to vector<2x24xf32>
    %c0_8 = arith.constant 0 : index
    %c0_9 = arith.constant 0 : index
    %23 = vector.load %arg4[%c0_8, %c0_9] : memref<24x16xf32, #tpu.memory_space<vmem>>, vector<24x16xf32>
    %cst_10 = arith.constant dense<0.000000e+00> : vector<2x16xf32>
    %24 = tpu.matmul %22, %23, %cst_10 {dimension_numbers = #tpu.dot_dimension_numbers<[1], [0], [0], [1], [0, 0, 1, 1], [], []>} : vector<2x24xf32>, vector<24x16xf32>, vector<2x16xf32> -> vector<2x16xf32>
    %c0_11 = arith.constant 0 : index
    %c0_12 = arith.constant 0 : index
    %25 = vector.load %arg5[%c0_11, %c0_12] : memref<1x16xf32, #tpu.memory_space<vmem>>, vector<1x16xf32>
    %26 = vector.broadcast %25 : vector<1x16xf32> to vector<2x16xf32>
    %27 = arith.addf %24, %26 : vector<2x16xf32>
    %cst_13 = arith.constant 0.000000e+00 : f32
    %28 = vector.broadcast %cst_13 : f32 to vector<2x16xf32>
    %29 = arith.maximumf %27, %28 : vector<2x16xf32>
    %30 = vector.shape_cast %29 : vector<2x16xf32> to vector<2x1x16xf32>
    %31 = vector.shape_cast %30 : vector<2x1x16xf32> to vector<2x16xf32>
    %c0_14 = arith.constant 0 : index
    %c0_15 = arith.constant 0 : index
    %32 = vector.load %arg1[%c0_14, %c0_15] : memref<2x24xf32, #tpu.memory_space<vmem>>, vector<2x24xf32>
    %c0_16 = arith.constant 0 : index
    %c0_17 = arith.constant 0 : index
    %33 = vector.load %arg6[%c0_16, %c0_17] : memref<24x16xf32, #tpu.memory_space<vmem>>, vector<24x16xf32>
    %cst_18 = arith.constant dense<0.000000e+00> : vector<2x16xf32>
    %34 = tpu.matmul %32, %33, %cst_18 {dimension_numbers = #tpu.dot_dimension_numbers<[1], [0], [0], [1], [0, 0, 1, 1], [], []>} : vector<2x24xf32>, vector<24x16xf32>, vector<2x16xf32> -> vector<2x16xf32>
    %35 = arith.addf %31, %34 : vector<2x16xf32>
    %c0_19 = arith.constant 0 : index
    %c0_20 = arith.constant 0 : index
    %36 = vector.load %arg7[%c0_19, %c0_20] : memref<1x16xf32, #tpu.memory_space<vmem>>, vector<1x16xf32>
    %37 = vector.broadcast %36 : vector<1x16xf32> to vector<2x16xf32>
    %38 = arith.addf %35, %37 : vector<2x16xf32>
    %c0_21 = arith.constant 0 : index
    %c0_22 = arith.constant 0 : index
    %39 = vector.load %arg8[%c0_21, %c0_22] : memref<16x8xf32, #tpu.memory_space<vmem>>, vector<16x8xf32>
    %cst_23 = arith.constant dense<0.000000e+00> : vector<2x8xf32>
    %40 = tpu.matmul %38, %39, %cst_23 {dimension_numbers = #tpu.dot_dimension_numbers<[1], [0], [0], [1], [0, 0, 1, 1], [], []>} : vector<2x16xf32>, vector<16x8xf32>, vector<2x8xf32> -> vector<2x8xf32>
    %c0_24 = arith.constant 0 : index
    %c0_25 = arith.constant 0 : index
    %41 = vector.load %arg9[%c0_24, %c0_25] : memref<1x8xf32, #tpu.memory_space<vmem>>, vector<1x8xf32>
    %42 = vector.broadcast %41 : vector<1x8xf32> to vector<2x8xf32>
    %43 = arith.addf %40, %42 : vector<2x8xf32>
    %cst_26 = arith.constant 2.000000e+01 : f32
    %44 = vector.broadcast %cst_26 : f32 to vector<2x8xf32>
    %45 = arith.cmpf ogt, %43, %44 : vector<2x8xf32>
    %cst_27 = arith.constant 2.000000e+01 : f32
    %46 = vector.broadcast %cst_27 : f32 to vector<2x8xf32>
    %47 = arith.minimumf %43, %46 : vector<2x8xf32>
    %48 = math.exp %47 : vector<2x8xf32>
    %49 = math.log1p %48 : vector<2x8xf32>
    %50 = arith.select %45, %43, %49 : vector<2x8xi1>, vector<2x8xf32>
    %c0_28 = arith.constant 0 : index
    %c0_29 = arith.constant 0 : index
    %51 = vector.load %arg10[%c0_28, %c0_29] : memref<2x8xf32, #tpu.memory_space<vmem>>, vector<2x8xf32>
    tpu.vector_store %arg10[%c0_28, %c0_29], %50 {strides = array<i32>} : memref<2x8xf32, #tpu.memory_space<vmem>>, vector<2x8xf32>,
    return
  }
}

</mosaic_0001>

<llo_original>
// kernel: tcn_forward.1
$region0: #{tcn_forward.1}
  #allocation0 [shape = 'u32[]', space=smem, size = 0x4, offset = 0x4, fixed_abs, tag = 'smem constant byte address 0x4 - core index']
  #allocation1 [shape = 'u32[72,128]{1,0:T(1,128)}', space=vmem, size = 0x9000, scoped, tag = 'internal scratch']
  %s0 = inlined_call_operand.vmem [shape: f32[2,16,4], index: 0, kind: input, shape index: {}]
  %s1 = inlined_call_operand.vmem [shape: f32[2,24], index: 1, kind: input, shape index: {}]
  %s2 = inlined_call_operand.vmem [shape: f32[12,8], index: 2, kind: input, shape index: {}]
  %s3 = inlined_call_operand.vmem [shape: f32[1,8], index: 3, kind: input, shape index: {}]
  %s4 = inlined_call_operand.vmem [shape: f32[24,16], index: 4, kind: input, shape index: {}]
  %s5 = inlined_call_operand.vmem [shape: f32[1,16], index: 5, kind: input, shape index: {}]
  %s6 = inlined_call_operand.vmem [shape: f32[24,16], index: 6, kind: input, shape index: {}]
  %s7 = inlined_call_operand.vmem [shape: f32[1,16], index: 7, kind: input, shape index: {}]
  %s8 = inlined_call_operand.vmem [shape: f32[16,8], index: 8, kind: input, shape index: {}]
  %s9 = inlined_call_operand.vmem [shape: f32[1,8], index: 9, kind: input, shape index: {}]
  %s10 = inlined_call_operand.hbm [shape: f32[2,8], index: 10, kind: output, shape index: {}]
  %s11 = sld [smem:[#allocation0]]
  $region50: #{tcn_forward.1} parent=0
    _
  %s13 = ssub.s32 1, %s11
  %s14 = scalar_select 0, %s13, %s11
  $region1: #{tcn_forward.1} parent=0
    #allocation2 [shape = 'u8[1024]{0}', space=vmem, size = 0x400, scoped, tag = 'output window, operand 0, single buffered']
    #allocation3 [shape = 's32[1]{0}', space=sflag, size = 0x4, scoped, tag = 'scoped memory for tcn_forward.1']
    %15 = vsyncpa [#allocation3], 0
    // Predicated region
    $region2: #{tcn_forward.1} parent=1 // pred_check
      _
    $region3: #{tcn_forward.1} parent=1 // pred_check_branch
      %17 = sbr.rel (0) target = $region5
    $region4: #{tcn_forward.1} parent=1 // pred_region
      _
    $region5: #{tcn_forward.1} parent=1 // pred_fallthru
      _
    // Predicated region
    $region6: #{tcn_forward.1} parent=1 // pred_check
      _
    $region7: #{tcn_forward.1} parent=1 // pred_check_branch
      %19 = sbr.rel (0) target = $region9
    $region8: #{tcn_forward.1} parent=1 // pred_region
      _
    $region9: #{tcn_forward.1} parent=1 // pred_fallthru
      _
    // Predicated region
    $region10: #{tcn_forward.1} parent=1 // pred_check
      _
    $region11: #{tcn_forward.1} parent=1 // pred_check_branch
      %21 = sbr.rel (0) target = $region13
    $region12: #{tcn_forward.1} parent=1 // pred_region
      _
    $region13: #{tcn_forward.1} parent=1 // pred_fallthru
      _
    // Predicated region
    $region14: #{tcn_forward.1} parent=1 // pred_check
      _
    $region15: #{tcn_forward.1} parent=1 // pred_check_branch
      %23 = sbr.rel (0) target = $region17
    $region16: #{tcn_forward.1} parent=1 // pred_region
      _
    $region17: #{tcn_forward.1} parent=1 // pred_fallthru
      _
    // Predicated region
    $region18: #{tcn_forward.1} parent=1 // pred_check
      _
    $region19: #{tcn_forward.1} parent=1 // pred_check_branch
      %25 = sbr.rel (0) target = $region21
    $region20: #{tcn_forward.1} parent=1 // pred_region
      _
    $region21: #{tcn_forward.1} parent=1 // pred_fallthru
      _
    // Predicated region
    $region22: #{tcn_forward.1} parent=1 // pred_check
      _
    $region23: #{tcn_forward.1} parent=1 // pred_check_branch
      %27 = sbr.rel (0) target = $region25
    $region24: #{tcn_forward.1} parent=1 // pred_region
      _
    $region25: #{tcn_forward.1} parent=1 // pred_fallthru
      _
    // Predicated region
    $region26: #{tcn_forward.1} parent=1 // pred_check
      _
    $region27: #{tcn_forward.1} parent=1 // pred_check_branch
      %29 = sbr.rel (0) target = $region29
    $region28: #{tcn_forward.1} parent=1 // pred_region
      _
    $region29: #{tcn_forward.1} parent=1 // pred_fallthru
      _
    // Predicated region
    $region30: #{tcn_forward.1} parent=1 // pred_check
      _
    $region31: #{tcn_forward.1} parent=1 // pred_check_branch
      %31 = sbr.rel (0) target = $region33
    $region32: #{tcn_forward.1} parent=1 // pred_region
      _
    $region33: #{tcn_forward.1} parent=1 // pred_fallthru
      _
    // Predicated region
    $region34: #{tcn_forward.1} parent=1 // pred_check
      _
    $region35: #{tcn_forward.1} parent=1 // pred_check_branch
      %33 = sbr.rel (0) target = $region37
    $region36: #{tcn_forward.1} parent=1 // pred_region
      _
    $region37: #{tcn_forward.1} parent=1 // pred_fallthru
      _
    // Predicated region
    $region38: #{tcn_forward.1} parent=1 // pred_check
      _
    $region39: #{tcn_forward.1} parent=1 // pred_check_branch
      %35 = sbr.rel (0) target = $region41
    $region40: #{tcn_forward.1} parent=1 // pred_region
      _
    $region41: #{tcn_forward.1} parent=1 // pred_fallthru
      _
    %v36 = vld [vmem:[%s0 + $0xd] sm:$0x7]
    %v37 = vld [vmem:[%s0 + $0x1d] sm:$0x7]
    %vm38 = vcmask 1042432
    %v39 = vsel %vm38, %v36, 0.0
    %v40 = vsel %vm38, %v37, 0.0
    %v43 = vrot.slane %v39, 1
    %v44 = vrot.slane %v40, 1
    %45 = vrot.lane.b32.xlu0 %v43, 4
    %v46 = vpop.permute.xlu0 %45
    %47 = vrot.lane.b32.xlu0 %v44, 4
    %v48 = vpop.permute.xlu0 %47
    %v51 = vrot.slane %v39, 2
    %v52 = vrot.slane %v40, 2
    %53 = vrot.lane.b32.xlu0 %v51, 8
    %v54 = vpop.permute.xlu0 %53
    %55 = vrot.lane.b32.xlu0 %v52, 8
    %v56 = vpop.permute.xlu0 %55
    %vm59 = vcmask 31744
    %v60 = vsel %vm59, %v39, %v46
    %v61 = vsel %vm59, %v40, %v48
    %vm62 = vcmask 64512
    %v63 = vsel %vm62, %v60, %v54
    %v64 = vsel %vm62, %v61, %v56
    %v65 = vld [vmem:[%s2] sm:$0xff]
    %v66 = vld [vmem:[%s2 + $0x8] sm:$0xf]
    %v67 = vld [vmem:[%s3] sm:$0x1]
    %v69 = vperm.slane %v67, 0
    %73 = vst [vmem:[#allocation1] ss:$4 sm:$0xff] %v63
    %s74 = scalar_lea.vmem [#allocation1], 1
    %75 = vst [vmem:[%s74] ss:$4 sm:$0xff] %v64
    %v76 = vld.sshfl [vmem:[#allocation1] sm:$0xff pattern:$0x73625140]
    %vm77 = vcmask 97280
    %v78 = vsel %vm77, %v76, 0
    %vm80 = vcmask 1043456
    %v82 = vsel %vm80, %v66, 0
    %84 = vmatpush.msra.mxu0 0.0
    %85 = vmatpush.msra.mxu0 0.0
    %86 = vmatpush.msra.mxu0 0.0
    %87 = vmatpush.msra.mxu0 0.0
    %88 = vmatpush.msra.mxu0 0.0
    %89 = vmatpush.msra.mxu0 0.0
    %90 = vmatpush.msra.mxu0 0.0
    %91 = vmatpush.msra.mxu0 0.0
    %92 = vmatpush.msra.mxu0 0.0
    %93 = vmatpush.msra.mxu0 0.0
    %94 = vmatpush.msra.mxu0 0.0
    %95 = vmatpush.msra.mxu0 0.0
    %96 = vmatpush.msra.mxu0 0.0
    %97 = vmatpush.msra.mxu0 0.0
    %98 = vmatpush.msra.mxu0 %v82
    %99 = vmatpush.msra.mxu0 %v65
    %100 = vmatmul.f32.gmra.mxu0 %v78
    %v101 = vpop.f32.mrf.mxu0
    %v102 = vadd.f32 %v69, %v101
    %103 = vdwg.mxu0
    %v104 = vmax.f32 %v102, 0.0
    %v106 = vrot.slane %v104, 2
    %vm108 = vcmask 1041408
    %v109 = vsel %vm108, %v104, 0.0
    %v110 = vsel %vm108, %v106, 0.0
    %v113 = vrot.slane %v109, 1
    %v114 = vrot.slane %v110, 1
    %115 = vrot.lane.b32.xlu0 %v113, 8
    %v116 = vpop.permute.xlu0 %115
    %117 = vrot.lane.b32.xlu0 %v114, 8
    %v118 = vpop.permute.xlu0 %117
    %v121 = vrot.slane %v109, 2
    %v122 = vrot.slane %v110, 2
    %123 = vrot.lane.b32.xlu0 %v121, 16
    %v124 = vpop.permute.xlu0 %123
    %125 = vrot.lane.b32.xlu0 %v122, 16
    %v126 = vpop.permute.xlu0 %125
    %v129 = vsel %vm62, %v109, %v116
    %v130 = vsel %vm62, %v110, %v118
    %vm131 = vcmask 130048
    %v132 = vsel %vm131, %v129, %v124
    %v133 = vsel %vm131, %v130, %v126
    %v134 = vld [vmem:[%s4] sm:$0xff]
    %v135 = vld [vmem:[%s4 + $0x8] sm:$0xff]
    %v136 = vld [vmem:[%s4 + $0x10] sm:$0xff]
    %v137 = vld [vmem:[%s5] sm:$0x1]
    %v139 = vperm.slane %v137, 0
    %v143 = vrot.slane %v133, 7
    %vm144 = vcmask 1041409
    %v145 = vsel %vm144, %v143, %v132
    %vm146 = vcmask 195584
    %v147 = vsel %vm146, %v145, 0
    %149 = vmatpush.msra.mxu0 0.0
    %150 = vmatpush.msra.mxu0 0.0
    %151 = vmatpush.msra.mxu0 0.0
    %152 = vmatpush.msra.mxu0 0.0
    %153 = vmatpush.msra.mxu0 0.0
    %154 = vmatpush.msra.mxu0 0.0
    %155 = vmatpush.msra.mxu0 0.0
    %156 = vmatpush.msra.mxu0 0.0
    %157 = vmatpush.msra.mxu0 0.0
    %158 = vmatpush.msra.mxu0 0.0
    %159 = vmatpush.msra.mxu0 0.0
    %160 = vmatpush.msra.mxu0 0.0
    %161 = vmatpush.msra.mxu0 0.0
    %162 = vmatpush.msra.mxu0 %v136
    %163 = vmatpush.msra.mxu0 %v135
    %164 = vmatpush.msra.mxu0 %v134
    %165 = vmatmul.f32.gmra.mxu0 %v147
    %v166 = vpop.f32.mrf.mxu0
    %v167 = vadd.f32 %v139, %v166
    %168 = vdwg.mxu0
    %v169 = vmax.f32 %v167, 0.0
    %v170 = vld [vmem:[%s1] sm:$0x3]
    %v171 = vld [vmem:[%s6] sm:$0xff]
    %v172 = vld [vmem:[%s6 + $0x8] sm:$0xff]
    %v173 = vld [vmem:[%s6 + $0x10] sm:$0xff]
    %v175 = vsel %vm146, %v170, 0
    %177 = vmatpush.msra.mxu0 0.0
    %178 = vmatpush.msra.mxu0 0.0
    %179 = vmatpush.msra.mxu0 0.0
    %180 = vmatpush.msra.mxu0 0.0
    %181 = vmatpush.msra.mxu0 0.0
    %182 = vmatpush.msra.mxu0 0.0
    %183 = vmatpush.msra.mxu0 0.0
    %184 = vmatpush.msra.mxu0 0.0
    %185 = vmatpush.msra.mxu0 0.0
    %186 = vmatpush.msra.mxu0 0.0
    %187 = vmatpush.msra.mxu0 0.0
    %188 = vmatpush.msra.mxu0 0.0
    %189 = vmatpush.msra.mxu0 0.0
    %190 = vmatpush.msra.mxu0 %v173
    %191 = vmatpush.msra.mxu0 %v172
    %192 = vmatpush.msra.mxu0 %v171
    %193 = vmatmul.f32.gmra.mxu0 %v175
    %v194 = vpop.f32.mrf.mxu0
    %v195 = vadd.f32 0.0, %v194
    %196 = vdwg.mxu0
    %v197 = vadd.f32 %v169, %v195
    %v198 = vld [vmem:[%s7] sm:$0x1]
    %v200 = vperm.slane %v198, 0
    %v202 = vadd.f32 %v197, %v200
    %v203 = vld [vmem:[%s8] sm:$0xff]
    %v204 = vld [vmem:[%s8 + $0x8] sm:$0xff]
    %v205 = vld [vmem:[%s9] sm:$0x1]
    %v207 = vperm.slane %v205, 0
    %v210 = vsel %vm131, %v202, 0
    %212 = vmatpush.msra.mxu0 0.0
    %213 = vmatpush.msra.mxu0 0.0
    %214 = vmatpush.msra.mxu0 0.0
    %215 = vmatpush.msra.mxu0 0.0
    %216 = vmatpush.msra.mxu0 0.0
    %217 = vmatpush.msra.mxu0 0.0
    %218 = vmatpush.msra.mxu0 0.0
    %219 = vmatpush.msra.mxu0 0.0
    %220 = vmatpush.msra.mxu0 0.0
    %221 = vmatpush.msra.mxu0 0.0
    %222 = vmatpush.msra.mxu0 0.0
    %223 = vmatpush.msra.mxu0 0.0
    %224 = vmatpush.msra.mxu0 0.0
    %225 = vmatpush.msra.mxu0 0.0
    %226 = vmatpush.msra.mxu0 %v204
    %227 = vmatpush.msra.mxu0 %v203
    %228 = vmatmul.f32.gmra.mxu0 %v210
    %v229 = vpop.f32.mrf.mxu0
    %v230 = vadd.f32 %v207, %v229
    %231 = vdwg.mxu0
    %vm232 = vcmp.gt.f32.partialorder %v230, 20.0
    %v233 = vmin.f32 %v230, 20.0
    %v234 = vmul.f32 %v233, 1.442695
    %v235 = vpow.pop %v234
    %v236 = vadd.f32 %v235, 1.0
    %v237 = vlog2.pop %v236
    %v238 = vmul.f32 %v237, 0.6931472
    %v239 = vmul.f32 -0.5, %v235
    %v240 = vadd.f32 %v239, 1.0
    %v241 = vmul.f32 %v240, %v235
    %v242 = vand.u32 2147483647, %v235
    %vm243 = vcmp.lt.f32.partialorder %v242, 0.0004427343
    %v244 = vsel %vm243, %v241, %v238
    %v245 = vsel %vm232, %v230, %v244
    %vm246 = vcmask 58368
    %247 = vst.msk [vmem:[#allocation2] sm:$0x3] %vm246, %v245
    // Predicated region
    $region42: #{tcn_forward.1} parent=1 // pred_check
      _
    $region43: #{tcn_forward.1} parent=1 // pred_check_branch
      %249 = sbr.rel (0) target = $region45
    $region44: #{tcn_forward.1} parent=1 // pred_region
      %251 = vsyncadd [#allocation3], 0
      %s253 = sshll.u32 [#allocation2], 4
      %s254 = int_to_ptr.vmem [resolvable:$true] %s253
      %s255 = sshll.u32 %s10, 4
      %s256 = int_to_ptr.hbm [resolvable:$true] %s255
      %258 = dma.vmem_to_hbm [thread:$0]  %s254, 32, %s256, [#allocation3]
    $region45: #{tcn_forward.1} parent=1 // pred_fallthru
      _
    // Predicated region
    $region46: #{tcn_forward.1} parent=1 // pred_check
      _
    $region47: #{tcn_forward.1} parent=1 // pred_check_branch
      %260 = sbr.rel (0) target = $region49
    $region48: #{tcn_forward.1} parent=1 // pred_region
      %262 = dma.done [#allocation3], 32
    $region49: #{tcn_forward.1} parent=1 // pred_fallthru
      _
    %263 = vsyncpa [#allocation3], 1

</llo_original>
